<compile_context>
chip_gen: v7x
topology: tpu7x:2x2x1
jax: 0.10.0
libtpu: 0.0.40
codegen_flags: <defaults>
</compile_context>

<pallas_src>
from functools import partial

import jax
import jax.numpy as jnp
from jax.experimental import pallas as pl
from jax.experimental.pallas import tpu as pltpu

# ---- module hyper-parameters (consistent with the PyTorch module) ----
INPUT_SIZE = 4           # data.shape[1]
SEQ_LENGTH = 15
HIDDEN_SIZE = 64
LATENT_SIZE = 16
BATCH = 2

FLAT = INPUT_SIZE * SEQ_LENGTH    # 60: flattened-input / contraction dim
OUT_W = 2 * LATENT_SIZE           # 32: fused output slab = [mu | logvar]


def _round_up(n, m):
    return ((n + m - 1) // m) * m


def _choose_bm(batch, cap):
    """Batch-tile rows: >=8 (sublane floor), single tile for tiny batches,
    otherwise >=2 tiles (dual-TensorCore on v7x) without ballooning padding,
    capped at `cap` rows."""
    b8 = _round_up(max(batch, 8), 8)
    if b8 <= 16:                      # tiny batch: splitting only adds overhead
        return b8
    half = _round_up((b8 + 1) // 2, 8)   # guarantees grid >= 2
    return min(half, cap)


def encoder_kernel(x_ref, w1_ref, b1_ref, wh_ref, bh_ref, out_ref):
    """Fused fc1 + ReLU + [fc_mu | fc_logvar] on one batch tile.

    x_ref:  [bm, 60]   flattened input rows
    w1_ref: [60, 64]   fc1 weight, already [in, out]
    b1_ref: [1, 64]    fc1 bias (broadcast-added on the VPU)
    wh_ref: [64, 32]   concat(fc_mu.W, fc_logvar.W) as [in, out]
    bh_ref: [1, 32]    concat(fc_mu.b, fc_logvar.b)
    out_ref:[bm, 32]   cols 0..15 = mu, 16..31 = logvar
    """
    h = jnp.maximum(
        jnp.dot(x_ref[...], w1_ref[...], preferred_element_type=jnp.float32)
        + b1_ref[...],
        0.0)                                                       # [bm, 64] f32
    out_ref[...] = (
        jnp.dot(h.astype(wh_ref.dtype), wh_ref[...],
                preferred_element_type=jnp.float32)
        + bh_ref[...]
    ).astype(out_ref.dtype)                                        # [bm, 32]


@partial(jax.jit, static_argnames=("block_cap", "stream_dtype"))
def encoder_forward(x, w1, b1, wh, bh, *, block_cap=2048,
                    stream_dtype=jnp.float32):
    """x: [B, seq_length, input_size] (or already [B, FLAT]) -> (mu, logvar)."""
    B = x.shape[0]
    x_flat = x.reshape(B, FLAT).astype(stream_dtype)   # == torch .view(-1, FLAT)

    bm = _choose_bm(B, block_cap)
    B_pad = _round_up(B, bm)
    if B_pad != B:
        x_flat = jnp.pad(x_flat, ((0, B_pad - B), (0, 0)))

    # weights may stream in bf16 (MXU-native); biases stay f32 (VPU add).
    w1 = w1.astype(stream_dtype)
    wh = wh.astype(stream_dtype)
    b1 = b1.astype(jnp.float32)
    bh = bh.astype(jnp.float32)

    out = pl.pallas_call(
        encoder_kernel,
        out_shape=jax.ShapeDtypeStruct((B_pad, OUT_W), jnp.float32),
        grid=(B_pad // bm,),
        in_specs=[
            pl.BlockSpec((bm, FLAT), lambda i: (i, 0)),            # batch-tiled
            pl.BlockSpec((FLAT, HIDDEN_SIZE), lambda i: (0, 0)),   # VMEM-resident
            pl.BlockSpec((1, HIDDEN_SIZE), lambda i: (0, 0)),
            pl.BlockSpec((HIDDEN_SIZE, OUT_W), lambda i: (0, 0)),
            pl.BlockSpec((1, OUT_W), lambda i: (0, 0)),
        ],
        out_specs=pl.BlockSpec((bm, OUT_W), lambda i: (i, 0)),
        compiler_params=pltpu.CompilerParams(
            dimension_semantics=("parallel",)),   # shards batch tiles over TCs
    )(x_flat, w1, b1, wh, bh)

    mu = out[:B, :LATENT_SIZE]
    logvar = out[:B, LATENT_SIZE:]
    return mu, logvar


def pack_heads(wmu_t, bmu, wlv_t, blv):
    """Fuse the two latent heads into one [64,32] weight + [1,32] bias."""
    wh = jnp.concatenate([wmu_t, wlv_t], axis=1)
    bh = jnp.concatenate([bmu, blv], axis=1)
    return wh, bh


def init_linear(key, in_features, out_features):
    """Deterministic PyTorch-style nn.Linear init (uniform +/- 1/sqrt(fan_in)).
    Returns weight already transposed to [in, out] plus bias [1, out]."""
    kw, kb = jax.random.split(key)
    bound = 1.0 / jnp.sqrt(jnp.float32(in_features))
    w = jax.random.uniform(kw, (in_features, out_features), jnp.float32,
                           minval=-bound, maxval=bound)
    b = jax.random.uniform(kb, (1, out_features), jnp.float32,
                           minval=-bound, maxval=bound)
    return w, b


if __name__ == "__main__":
    key = jax.random.PRNGKey(0)
    k_x, k1, k2, k3 = jax.random.split(key, 4)

    # input: [B, seq_length, input_size]; PyTorch view flattens to [B, FLAT]
    x = jax.random.normal(k_x, (BATCH, SEQ_LENGTH, INPUT_SIZE), jnp.float32)

    w1_t, b1 = init_linear(k1, FLAT, HIDDEN_SIZE)
    wmu_t, bmu = init_linear(k2, HIDDEN_SIZE, LATENT_SIZE)
    wlv_t, blv = init_linear(k3, HIDDEN_SIZE, LATENT_SIZE)
    wh, bh = pack_heads(wmu_t, bmu, wlv_t, blv)

    mu, logvar = encoder_forward(x, w1_t, b1, wh, bh)
    jax.block_until_ready((mu, logvar))

    # reference check in plain JAX (unfused, unpadded math)
    x_flat = x.reshape(BATCH, FLAT)
    h_ref = jnp.maximum(x_flat @ w1_t + b1, 0.0)
    mu_ref = h_ref @ wmu_t + bmu
    lv_ref = h_ref @ wlv_t + blv

    assert mu.shape == (BATCH, LATENT_SIZE) and logvar.shape == (BATCH, LATENT_SIZE)
    assert jnp.allclose(mu, mu_ref, atol=1e-4, rtol=1e-4)
    assert jnp.allclose(logvar, lv_ref, atol=1e-4, rtol=1e-4)

    # NOTE: reparameterize() is not part of forward(); forward returns (mu, logvar).
    print("KERNEL_OK")
</pallas_src>

<mosaic_0001>
module attributes {stable_mosaic.version = 11 : i64} {
  func.func @encoder_kernel(%arg0: i32, %arg1: memref<8x60xf32, #tpu.memory_space<vmem>>, %arg2: memref<60x64xf32, #tpu.memory_space<vmem>>, %arg3: memref<1x64xf32, #tpu.memory_space<vmem>>, %arg4: memref<64x32xf32, #tpu.memory_space<vmem>>, %arg5: memref<1x32xf32, #tpu.memory_space<vmem>>, %arg6: memref<8x32xf32, #tpu.memory_space<vmem>>) attributes {dimension_semantics = [#tpu.dimension_semantics<parallel>], iteration_bounds = array<i64: 1>, scalar_prefetch = 0 : i64, scratch_operands = 0 : i64, tpu.core_type = #tpu.core_type<tc>, window_params = [{transform_indices = @transform_0, window_bounds = array<i64: 8, 60>}, {pipeline_mode = #tpu.pipeline_mode<synchronous>, transform_indices = @transform_1, window_bounds = array<i64: 60, 64>}, {pipeline_mode = #tpu.pipeline_mode<synchronous>, transform_indices = @transform_2, window_bounds = array<i64: 1, 64>}, {pipeline_mode = #tpu.pipeline_mode<synchronous>, transform_indices = @transform_3, window_bounds = array<i64: 64, 32>}, {pipeline_mode = #tpu.pipeline_mode<synchronous>, transform_indices = @transform_4, window_bounds = array<i64: 1, 32>}, {transform_indices = @transform_5, window_bounds = array<i64: 8, 32>}]} {
    %c0 = arith.constant 0 : index
    %c0_0 = arith.constant 0 : index
    %0 = vector.load %arg1[%c0, %c0_0] : memref<8x60xf32, #tpu.memory_space<vmem>>, vector<8x60xf32>
    %c0_1 = arith.constant 0 : index
    %c0_2 = arith.constant 0 : index
    %1 = vector.load %arg2[%c0_1, %c0_2] : memref<60x64xf32, #tpu.memory_space<vmem>>, vector<60x64xf32>
    %cst = arith.constant dense<0.000000e+00> : vector<8x64xf32>
    %2 = tpu.matmul %0, %1, %cst {dimension_numbers = #tpu.dot_dimension_numbers<[1], [0], [0], [1], [0, 0, 1, 1], [], []>} : vector<8x60xf32>, vector<60x64xf32>, vector<8x64xf32> -> vector<8x64xf32>
    %c0_3 = arith.constant 0 : index
    %c0_4 = arith.constant 0 : index
    %3 = vector.load %arg3[%c0_3, %c0_4] : memref<1x64xf32, #tpu.memory_space<vmem>>, vector<1x64xf32>
    %4 = vector.broadcast %3 : vector<1x64xf32> to vector<8x64xf32>
    %5 = arith.addf %2, %4 : vector<8x64xf32>
    %cst_5 = arith.constant 0.000000e+00 : f32
    %6 = vector.broadcast %cst_5 : f32 to vector<8x64xf32>
    %7 = arith.maximumf %5, %6 : vector<8x64xf32>
    %c0_6 = arith.constant 0 : index
    %c0_7 = arith.constant 0 : index
    %8 = vector.load %arg4[%c0_6, %c0_7] : memref<64x32xf32, #tpu.memory_space<vmem>>, vector<64x32xf32>
    %cst_8 = arith.constant dense<0.000000e+00> : vector<8x32xf32>
    %9 = tpu.matmul %7, %8, %cst_8 {dimension_numbers = #tpu.dot_dimension_numbers<[1], [0], [0], [1], [0, 0, 1, 1], [], []>} : vector<8x64xf32>, vector<64x32xf32>, vector<8x32xf32> -> vector<8x32xf32>
    %c0_9 = arith.constant 0 : index
    %c0_10 = arith.constant 0 : index
    %10 = vector.load %arg5[%c0_9, %c0_10] : memref<1x32xf32, #tpu.memory_space<vmem>>, vector<1x32xf32>
    %11 = vector.broadcast %10 : vector<1x32xf32> to vector<8x32xf32>
    %12 = arith.addf %9, %11 : vector<8x32xf32>
    %c0_11 = arith.constant 0 : index
    %c0_12 = arith.constant 0 : index
    %13 = vector.load %arg6[%c0_11, %c0_12] : memref<8x32xf32, #tpu.memory_space<vmem>>, vector<8x32xf32>
    tpu.vector_store %arg6[%c0_11, %c0_12], %12 {strides = array<i32>} : memref<8x32xf32, #tpu.memory_space<vmem>>, vector<8x32xf32>,
    return
  }
  func.func @transform_0(%arg0: i32) -> (i32, i32) {
    %c0_i32 = arith.constant 0 : i32
    %c0_i32_0 = arith.constant 0 : i32
    return %arg0, %c0_i32 : i32, i32
  }
  func.func @transform_1(%arg0: i32) -> (i32, i32) {
    %c0_i32 = arith.constant 0 : i32
    %c0_i32_0 = arith.constant 0 : i32
    %c0_i32_1 = arith.constant 0 : i32
    return %c0_i32, %c0_i32_0 : i32, i32
  }
  func.func @transform_2(%arg0: i32) -> (i32, i32) {
    %c0_i32 = arith.constant 0 : i32
    %c0_i32_0 = arith.constant 0 : i32
    %c0_i32_1 = arith.constant 0 : i32
    return %c0_i32, %c0_i32_0 : i32, i32
  }
  func.func @transform_3(%arg0: i32) -> (i32, i32) {
    %c0_i32 = arith.constant 0 : i32
    %c0_i32_0 = arith.constant 0 : i32
    %c0_i32_1 = arith.constant 0 : i32
    return %c0_i32, %c0_i32_0 : i32, i32
  }
  func.func @transform_4(%arg0: i32) -> (i32, i32) {
    %c0_i32 = arith.constant 0 : i32
    %c0_i32_0 = arith.constant 0 : i32
    %c0_i32_1 = arith.constant 0 : i32
    return %c0_i32, %c0_i32_0 : i32, i32
  }
  func.func @transform_5(%arg0: i32) -> (i32, i32) {
    %c0_i32 = arith.constant 0 : i32
    %c0_i32_0 = arith.constant 0 : i32
    return %arg0, %c0_i32 : i32, i32
  }
}

</mosaic_0001>

<llo_original>
// kernel: encoder_forward.1
$region0: #{encoder_forward.1}
  #allocation0 [shape = 'u32[]', space=smem, size = 0x4, offset = 0x4, fixed_abs, tag = 'smem constant byte address 0x4 - core index']
  #allocation1 [shape = 'u32[144,128]{1,0:T(1,128)}', space=vmem, size = 0x12000, scoped, tag = 'internal scratch']
  %s0 = inlined_call_operand.vmem [shape: f32[8,60], index: 0, kind: input, shape index: {}]
  %s1 = inlined_call_operand.vmem [shape: f32[60,64], index: 1, kind: input, shape index: {}]
  %s2 = inlined_call_operand.vmem [shape: f32[1,64], index: 2, kind: input, shape index: {}]
  %s3 = inlined_call_operand.vmem [shape: f32[64,32], index: 3, kind: input, shape index: {}]
  %s4 = inlined_call_operand.vmem [shape: f32[1,32], index: 4, kind: input, shape index: {}]
  %s5 = inlined_call_operand.vmem [shape: f32[8,32], index: 5, kind: output, shape index: {}]
  %s6 = sld [smem:[#allocation0]]
  $region30: #{encoder_forward.1} parent=0
    _
  %s8 = ssub.s32 1, %s6
  %s9 = scalar_select 0, %s8, %s6
  // Predicated region
  $region2: #{encoder_forward.1} parent=0 // pred_check
    _
  $region3: #{encoder_forward.1} parent=0 // pred_check_branch
    %11 = sbr.rel (0) target = $region5
  $region4: #{encoder_forward.1} parent=0 // pred_region
    _
  $region5: #{encoder_forward.1} parent=0 // pred_fallthru
    _
  // Predicated region
  $region6: #{encoder_forward.1} parent=0 // pred_check
    _
  $region7: #{encoder_forward.1} parent=0 // pred_check_branch
    %13 = sbr.rel (0) target = $region9
  $region8: #{encoder_forward.1} parent=0 // pred_region
    _
  $region9: #{encoder_forward.1} parent=0 // pred_fallthru
    _
  // Predicated region
  $region10: #{encoder_forward.1} parent=0 // pred_check
    _
  $region11: #{encoder_forward.1} parent=0 // pred_check_branch
    %15 = sbr.rel (0) target = $region13
  $region12: #{encoder_forward.1} parent=0 // pred_region
    _
  $region13: #{encoder_forward.1} parent=0 // pred_fallthru
    _
  // Predicated region
  $region14: #{encoder_forward.1} parent=0 // pred_check
    _
  $region15: #{encoder_forward.1} parent=0 // pred_check_branch
    %17 = sbr.rel (0) target = $region17
  $region16: #{encoder_forward.1} parent=0 // pred_region
    _
  $region17: #{encoder_forward.1} parent=0 // pred_fallthru
    _
  // Predicated region
  $region18: #{encoder_forward.1} parent=0 // pred_check
    _
  $region19: #{encoder_forward.1} parent=0 // pred_check_branch
    %19 = sbr.rel (0) target = $region21
  $region20: #{encoder_forward.1} parent=0 // pred_region
    _
  $region21: #{encoder_forward.1} parent=0 // pred_fallthru
    _
  %v20 = vld [vmem:[%s0] sm:$0xff]
  %v21 = vld [vmem:[%s1] sm:$0xff]
  %v22 = vld [vmem:[%s1 + $0x8] sm:$0xff]
  %v23 = vld [vmem:[%s1 + $0x10] sm:$0xff]
  %v24 = vld [vmem:[%s1 + $0x18] sm:$0xff]
  %v25 = vld [vmem:[%s1 + $0x20] sm:$0xff]
  %v26 = vld [vmem:[%s1 + $0x28] sm:$0xff]
  %v27 = vld [vmem:[%s1 + $0x30] sm:$0xff]
  %v28 = vld [vmem:[%s1 + $0x38] sm:$0xf]
  %v29 = vld [vmem:[%s2] sm:$0x1]
  %v31 = vlaneseq
  %v32 = vshrl.u32 %v31, 7
  %v33 = vsub.s32 0, %v32
  %v34 = vrot.slane %v29, %v33
  %vm36 = vcmask 490496
  %v38 = vsel %vm36, %v20, 0
  %vm40 = vcmask 1043456
  %v42 = vsel %vm40, %v28, 0
  %44 = vmatprep.subr.mxu0 0.0
  %45 = vmatpush1.msra.mxu0 %v21
  %46 = vmatprep.subr.mxu0 0.0
  %47 = vmatpush1.msra.mxu0 %v22
  %48 = vmatprep.subr.mxu0 0.0
  %49 = vmatpush1.msra.mxu0 %v23
  %50 = vmatprep.subr.mxu0 0.0
  %51 = vmatpush1.msra.mxu0 %v24
  %52 = vmatprep.subr.mxu0 0.0
  %53 = vmatpush1.msra.mxu0 %v25
  %54 = vmatprep.subr.mxu0 0.0
  %55 = vmatpush1.msra.mxu0 %v26
  %56 = vmatprep.subr.mxu0 0.0
  %57 = vmatpush1.msra.mxu0 %v27
  %58 = vmatprep.subr.mxu0 0.0
  %59 = vmatpush1.msra.mxu0 %v42
  %60 = vmatprep.subr.mxu0 0.0
  %61 = vmatpush1.msra.mxu0 0.0
  %62 = vmatprep.subr.mxu0 0.0
  %63 = vmatpush1.msra.mxu0 0.0
  %64 = vmatprep.subr.mxu0 0.0
  %65 = vmatpush1.msra.mxu0 0.0
  %66 = vmatprep.subr.mxu0 0.0
  %67 = vmatpush1.msra.mxu0 0.0
  %68 = vmatprep.subr.mxu0 0.0
  %69 = vmatpush1.msra.mxu0 0.0
  %70 = vmatprep.subr.mxu0 0.0
  %71 = vmatpush1.msra.mxu0 0.0
  %72 = vmatprep.subr.mxu0 0.0
  %73 = vmatpush1.msra.mxu0 0.0
  %74 = vmatprep.subr.mxu0 0.0
  %75 = vmatpush1.msra.mxu0 0.0
  %76 = vmatprep.subr.mxu0 0.0
  %77 = vmatpush1.msra.mxu0 0.0
  %78 = vmatprep.subr.mxu0 0.0
  %79 = vmatpush1.msra.mxu0 0.0
  %80 = vmatprep.subr.mxu0 0.0
  %81 = vmatpush1.msra.mxu0 0.0
  %82 = vmatprep.subr.mxu0 0.0
  %83 = vmatpush1.msra.mxu0 0.0
  %84 = vmatprep.subr.mxu0 0.0
  %85 = vmatpush1.msra.mxu0 0.0
  %86 = vmatprep.subr.mxu0 0.0
  %87 = vmatpush1.msra.mxu0 0.0
  %88 = vmatprep.subr.mxu0 0.0
  %89 = vmatpush1.msra.mxu0 0.0
  %90 = vmatprep.subr.mxu0 0.0
  %91 = vmatpush1.msra.mxu0 0.0
  %92 = vmatprep.subr.mxu0 0.0
  %93 = vmatpush1.msra.mxu0 0.0
  %94 = vmatprep.subr.mxu0 0.0
  %95 = vmatpush1.msra.mxu0 0.0
  %96 = vmatprep.subr.mxu0 0.0
  %97 = vmatpush1.msra.mxu0 0.0
  %98 = vmatprep.subr.mxu0 0.0
  %99 = vmatpush1.msra.mxu0 0.0
  %100 = vmatprep.subr.mxu0 0.0
  %101 = vmatpush1.msra.mxu0 0.0
  %102 = vmatprep.subr.mxu0 0.0
  %103 = vmatpush1.msra.mxu0 0.0
  %104 = vmatprep.subr.mxu0 0.0
  %105 = vmatpush1.msra.mxu0 0.0
  %106 = vmatprep.subr.mxu0 0.0
  %107 = vmatpush1.msra.mxu0 0.0
  %108 = vmatprep.mubr.f32.mxu0 0.0
  %109 = vmatmul.mubr.f32.gmra.mrb[0].mxu0 %v38
  %v110 = vpop.f32.mrb[0].mxu0
  %v111 = vadd.f32 %v34, %v110
  %v112 = vpop.f32.mrb[0].mxu0
  %113 = vdwg.mxu0
  %v114 = vmax.f32 %v111, 0.0
  %v115 = vld [vmem:[%s3] sm:$0xff]
  %v116 = vld [vmem:[%s3 + $0x8] sm:$0xff]
  %v117 = vld [vmem:[%s3 + $0x10] sm:$0xff]
  %v118 = vld [vmem:[%s3 + $0x18] sm:$0xff]
  %v119 = vld [vmem:[%s3 + $0x20] sm:$0xff]
  %v120 = vld [vmem:[%s3 + $0x28] sm:$0xff]
  %v121 = vld [vmem:[%s3 + $0x30] sm:$0xff]
  %v122 = vld [vmem:[%s3 + $0x38] sm:$0xff]
  %v123 = vld [vmem:[%s4] sm:$0x1]
  %v125 = vlaneseq
  %v126 = vshrl.u32 %v125, 7
  %v127 = vsub.s32 0, %v126
  %v128 = vrot.slane %v123, %v127
  %vm130 = vcmask 523264
  %v132 = vsel %vm130, %v114, 0
  %134 = vmatprep.subr.mxu0 0.0
  %135 = vmatpush1.msra.mxu0 %v115
  %136 = vmatprep.subr.mxu0 0.0
  %137 = vmatpush1.msra.mxu0 %v116
  %138 = vmatprep.subr.mxu0 0.0
  %139 = vmatpush1.msra.mxu0 %v117
  %140 = vmatprep.subr.mxu0 0.0
  %141 = vmatpush1.msra.mxu0 %v118
  %142 = vmatprep.subr.mxu0 0.0
  %143 = vmatpush1.msra.mxu0 %v119
  %144 = vmatprep.subr.mxu0 0.0
  %145 = vmatpush1.msra.mxu0 %v120
  %146 = vmatprep.subr.mxu0 0.0
  %147 = vmatpush1.msra.mxu0 %v121
  %148 = vmatprep.subr.mxu0 0.0
  %149 = vmatpush1.msra.mxu0 %v122
  %150 = vmatprep.subr.mxu0 0.0
  %151 = vmatpush1.msra.mxu0 0.0
  %152 = vmatprep.subr.mxu0 0.0
  %153 = vmatpush1.msra.mxu0 0.0
  %154 = vmatprep.subr.mxu0 0.0
  %155 = vmatpush1.msra.mxu0 0.0
  %156 = vmatprep.subr.mxu0 0.0
  %157 = vmatpush1.msra.mxu0 0.0
  %158 = vmatprep.subr.mxu0 0.0
  %159 = vmatpush1.msra.mxu0 0.0
  %160 = vmatprep.subr.mxu0 0.0
  %161 = vmatpush1.msra.mxu0 0.0
  %162 = vmatprep.subr.mxu0 0.0
  %163 = vmatpush1.msra.mxu0 0.0
  %164 = vmatprep.subr.mxu0 0.0
  %165 = vmatpush1.msra.mxu0 0.0
  %166 = vmatprep.subr.mxu0 0.0
  %167 = vmatpush1.msra.mxu0 0.0
  %168 = vmatprep.subr.mxu0 0.0
  %169 = vmatpush1.msra.mxu0 0.0
  %170 = vmatprep.subr.mxu0 0.0
  %171 = vmatpush1.msra.mxu0 0.0
  %172 = vmatprep.subr.mxu0 0.0
  %173 = vmatpush1.msra.mxu0 0.0
  %174 = vmatprep.subr.mxu0 0.0
  %175 = vmatpush1.msra.mxu0 0.0
  %176 = vmatprep.subr.mxu0 0.0
  %177 = vmatpush1.msra.mxu0 0.0
  %178 = vmatprep.subr.mxu0 0.0
  %179 = vmatpush1.msra.mxu0 0.0
  %180 = vmatprep.subr.mxu0 0.0
  %181 = vmatpush1.msra.mxu0 0.0
  %182 = vmatprep.subr.mxu0 0.0
  %183 = vmatpush1.msra.mxu0 0.0
  %184 = vmatprep.subr.mxu0 0.0
  %185 = vmatpush1.msra.mxu0 0.0
  %186 = vmatprep.subr.mxu0 0.0
  %187 = vmatpush1.msra.mxu0 0.0
  %188 = vmatprep.subr.mxu0 0.0
  %189 = vmatpush1.msra.mxu0 0.0
  %190 = vmatprep.subr.mxu0 0.0
  %191 = vmatpush1.msra.mxu0 0.0
  %192 = vmatprep.subr.mxu0 0.0
  %193 = vmatpush1.msra.mxu0 0.0
  %194 = vmatprep.subr.mxu0 0.0
  %195 = vmatpush1.msra.mxu0 0.0
  %196 = vmatprep.subr.mxu0 0.0
  %197 = vmatpush1.msra.mxu0 0.0
  %198 = vmatprep.mubr.f32.mxu0 0.0
  %199 = vmatmul.mubr.f32.gmra.mrb[0].mxu0 %v132
  %v200 = vpop.f32.mrb[0].mxu0
  %v201 = vadd.f32 %v128, %v200
  %v202 = vpop.f32.mrb[0].mxu0
  %203 = vdwg.mxu0
  %vm204 = vcmask 261120
  %205 = vst.msk [vmem:[%s5] sm:$0xff] %vm204, %v201
  // Predicated region
  $region22: #{encoder_forward.1} parent=0 // pred_check
    _
  $region23: #{encoder_forward.1} parent=0 // pred_check_branch
    %207 = sbr.rel (0) target = $region25
  $region24: #{encoder_forward.1} parent=0 // pred_region
    _
  $region25: #{encoder_forward.1} parent=0 // pred_fallthru
    _
  // Predicated region
  $region26: #{encoder_forward.1} parent=0 // pred_check
    _
  $region27: #{encoder_forward.1} parent=0 // pred_check_branch
    %209 = sbr.rel (0) target = $region29
  $region28: #{encoder_forward.1} parent=0 // pred_region
    _
  $region29: #{encoder_forward.1} parent=0 // pred_fallthru
    _

</llo_original>
